<compile_context>
chip_gen: v7x
topology: tpu7x:2x2x1
jax: 0.10.0
libtpu: 0.0.40
codegen_flags: <defaults>
</compile_context>

<pallas_src>
import functools

import jax
import jax.numpy as jnp
from jax.experimental import pallas as pl
from jax.experimental.pallas import tpu as pltpu


def _round_up(x, k):
    return (x + k - 1) // k * k


def _convnet_kernel(x_ref, wconv_ref, wfc_ref, bfc_ref, out_ref, *,
                    n_chunks, chunk_rows, P, Kw):
    # x:     (tile_b, L_pad)        bf16  (raw flattened input rows)
    # wconv: (Kw, d_pad)            bf16  (rows >= K are zero)
    # wfc:   (d_pad, cells_pad)     f32
    # bfc:   (1, cells_pad)         f32
    # out:   (tile_b, cells_pad)    f32
    wconv = wconv_ref[...]
    wfc = wfc_ref[...]
    bias = bfc_ref[...]

    def compute_rows(r0):
        xr = x_ref[pl.ds(r0, chunk_rows), :]                 # (chunk, L_pad) bf16
        # Conv2d(1, d, (m, 4)) fused with MaxPool2d((P, 1)): one lane-dense
        # (chunk, Kw) @ (Kw, d_pad) MXU matmul per window position, folded
        # into a running max so f32 temps stay at (chunk_rows, d_pad).
        pooled = jnp.dot(xr[:, 0:Kw], wconv,
                         preferred_element_type=jnp.float32)
        for p in range(1, P):                                # P is small (motif scan)
            s = jnp.dot(xr[:, 4 * p:4 * p + Kw], wconv,
                        preferred_element_type=jnp.float32)
            pooled = jnp.maximum(pooled, s)
        # ReLU after the pool (they commute; padded rows are zero -> safe).
        pooled = jnp.maximum(pooled, 0.0)
        # Linear(d, cells) kept in f32 (tiny matmul, exact bias/FC path).
        out = jnp.dot(pooled, wfc, preferred_element_type=jnp.float32) + bias
        out_ref[pl.ds(r0, chunk_rows), :] = out.astype(out_ref.dtype)

    if n_chunks == 1:
        compute_rows(0)
    else:
        def body(c, carry):
            compute_rows(pl.multiple_of(c * chunk_rows, chunk_rows))
            return carry
        jax.lax.fori_loop(0, n_chunks, body, 0)


def convnet_forward(x, w_conv, w_fc, b_fc, *, m):
    """x: (B, 1, n, 4) f32, w_conv: (d, 1, m, 4), w_fc: (cells, d), b_fc: (cells,)."""
    B, C, n, four = x.shape
    assert C == 1 and four == 4 and n >= m
    d = w_conv.shape[0]
    cells = w_fc.shape[0]
    P = n - m + 1
    K = 4 * m

    LANE, SUB = 128, 8
    Kw = _round_up(K, LANE)                       # lane-dense conv window width
    d_pad = _round_up(d, LANE)
    cells_pad = _round_up(cells, LANE)
    # Row length so every 128-wide window slice stays in bounds.
    L_pad = _round_up(max(4 * n, 4 * (P - 1) + Kw), LANE)

    # ---- VMEM-aware tile sizing (multi-MB tiles per grid step) ----
    try:
        vmem_bytes = int(pltpu.get_tpu_info().vmem_capacity_bytes)
    except Exception:
        vmem_bytes = 64 << 20                     # conservative (v7x physical)

    CHUNK = 512                                   # in-kernel row chunk
    weights_bytes = Kw * d_pad * 2 + d_pad * cells_pad * 4 + cells_pad * 4
    temps_bytes = 6 * CHUNK * d_pad * 4 + 2 * CHUNK * L_pad * 2
    bytes_per_row = 2 * (L_pad * 2) + 2 * (cells_pad * 4)   # dbl-buffered in+out
    vmem_budget = int(vmem_bytes * 0.4) - weights_bytes - temps_bytes

    target_x_bytes = 8 << 20                      # ~8 MB of activations per step
    tile_b = min(max(SUB, target_x_bytes // (L_pad * 2)),
                 max(SUB, vmem_budget // bytes_per_row))
    tile_b = max(SUB, tile_b // SUB * SUB)

    B_ceil = _round_up(B, SUB)
    tile_b = min(tile_b, B_ceil)
    # Keep >= 2 grid steps when the batch allows it (v7x: 2 TCs share "parallel").
    if B_ceil // tile_b < 2 and B_ceil >= 2 * SUB:
        tile_b = max(SUB, (B_ceil // 2) // SUB * SUB)
    if tile_b > CHUNK:
        tile_b = tile_b // CHUNK * CHUNK          # whole in-kernel chunks
        chunk_rows = CHUNK
    else:
        chunk_rows = tile_b
    n_chunks = tile_b // chunk_rows
    B_pad = _round_up(B, tile_b)
    grid = (B_pad // tile_b,)

    est_vmem = (2 * tile_b * L_pad * 2            # x tile, double-buffered
                + 2 * tile_b * cells_pad * 4      # out tile, double-buffered
                + weights_bytes
                + 6 * chunk_rows * d_pad * 4
                + 2 * chunk_rows * L_pad * 2)
    vmem_limit = min(int(vmem_bytes * 0.9),
                     max(32 << 20, 2 * est_vmem + (8 << 20)))

    # ---- glue: flatten rows + padded parameter layout (plain JAX) ----
    x_rows = jnp.pad(x.reshape(B, 4 * n),
                     ((0, B_pad - B), (0, L_pad - 4 * n))).astype(jnp.bfloat16)
    wconv_mat = jnp.zeros((Kw, d_pad), jnp.float32)
    wconv_mat = wconv_mat.at[:K, :d].set(w_conv.reshape(d, K).T).astype(jnp.bfloat16)
    wfc_mat = jnp.zeros((d_pad, cells_pad), jnp.float32).at[:d, :cells].set(w_fc.T)
    bfc_mat = jnp.zeros((1, cells_pad), jnp.float32).at[:, :cells].set(b_fc[None, :])

    flops = 2 * B_pad * (P * Kw * d_pad + d_pad * cells_pad)
    bytes_accessed = (B_pad * L_pad * 2 + B_pad * cells_pad * 4 + weights_bytes)
    cost = pl.CostEstimate(flops=flops, transcendentals=0,
                           bytes_accessed=bytes_accessed)

    kernel = functools.partial(_convnet_kernel, n_chunks=n_chunks,
                               chunk_rows=chunk_rows, P=P, Kw=Kw)

    out_padded = pl.pallas_call(
        kernel,
        out_shape=jax.ShapeDtypeStruct((B_pad, cells_pad), jnp.float32),
        grid=grid,
        in_specs=[
            pl.BlockSpec((tile_b, L_pad), lambda i: (i, 0)),      # raw input rows
            pl.BlockSpec((Kw, d_pad), lambda i: (0, 0)),          # conv weight (bf16)
            pl.BlockSpec((d_pad, cells_pad), lambda i: (0, 0)),   # fc weight (f32)
            pl.BlockSpec((1, cells_pad), lambda i: (0, 0)),       # fc bias   (f32)
        ],
        out_specs=pl.BlockSpec((tile_b, cells_pad), lambda i: (i, 0)),
        compiler_params=pltpu.CompilerParams(
            dimension_semantics=("parallel",),
            vmem_limit_bytes=int(vmem_limit)),
        cost_estimate=cost,
    )(x_rows, wconv_mat, wfc_mat, bfc_mat)

    return out_padded[:B, :cells]


def _reference_forward(x, w_conv, w_fc, b_fc, *, m):
    """Plain-JAX f32 reference matching the PyTorch forward semantics."""
    B, _, n, _ = x.shape
    P = n - m + 1
    idx = jnp.arange(P)[:, None] + jnp.arange(m)[None, :]
    patches = x[:, 0, :, :][:, idx, :]                             # (B, P, m, 4)
    conv = jnp.einsum("bpmw,dmw->bpd", patches, w_conv[:, 0])      # (B, P, d)
    conv = jnp.maximum(conv, 0.0)
    pooled = jnp.max(conv, axis=1)                                 # (B, d)
    return pooled @ w_fc.T + b_fc[None, :]


def _loguniform(key, a, b):
    u = jax.random.uniform(key, ())
    return 10.0 ** ((jnp.log10(b) - jnp.log10(a)) * u + jnp.log10(a))


if __name__ == "__main__":
    # Small shapes consistent with the module: d filters, (m, 4) kernel,
    # sequences of length n with 4 one-hot channels, `cells` outputs.
    B, d, m, n, cells = 2, 8, 5, 16, 4

    key = jax.random.PRNGKey(0)
    k_sm, k_sn, k_wc, k_wf, k_x = jax.random.split(key, 5)

    # Deterministic stand-ins for the PyTorch weights_init (loguniform sigmas,
    # normal weights scaled by sigma**2, bias filled with 1e-5).
    sigma_motifs = _loguniform(k_sm, 1e-7, 1e-3)
    sigma_net = _loguniform(k_sn, 1e-5, 1e-2)
    w_conv = (sigma_motifs ** 2) * jax.random.normal(k_wc, (d, 1, m, 4), jnp.float32)
    w_fc = (sigma_net ** 2) * jax.random.normal(k_wf, (cells, d), jnp.float32)
    b_fc = jnp.full((cells,), 1e-5, jnp.float32)

    # TODO(synk): optimizer / criterion construction in __init__ has no forward-pass
    # equivalent and is intentionally not implemented.

    x = jax.random.uniform(k_x, (B, 1, n, 4), jnp.float32)

    out = convnet_forward(x, w_conv, w_fc, b_fc, m=m)
    out = jax.block_until_ready(out)

    ref = _reference_forward(x, w_conv, w_fc, b_fc, m=m)
    assert out.shape == (B, cells)
    # bf16 conv operands with f32 accumulation and an all-f32 FC path: allow
    # ~1% relative error on the (tiny) conv contributions; bias stays exact.
    assert jnp.allclose(out, ref, atol=1e-6, rtol=2e-2), (out, ref)

    print("KERNEL_OK")
</pallas_src>

<mosaic_0001>
module attributes {stable_mosaic.version = 11 : i64} {
  func.func @_convnet_kernel(%arg0: i32, %arg1: memref<8x256xbf16, #tpu.memory_space<vmem>>, %arg2: memref<128x128xbf16, #tpu.memory_space<vmem>>, %arg3: memref<128x128xf32, #tpu.memory_space<vmem>>, %arg4: memref<1x128xf32, #tpu.memory_space<vmem>>, %arg5: memref<8x128xf32, #tpu.memory_space<vmem>>) attributes {dimension_semantics = [#tpu.dimension_semantics<parallel>], iteration_bounds = array<i64: 1>, scalar_prefetch = 0 : i64, scratch_operands = 0 : i64, tpu.core_type = #tpu.core_type<tc>, window_params = [{transform_indices = @transform_0, window_bounds = array<i64: 8, 256>}, {pipeline_mode = #tpu.pipeline_mode<synchronous>, transform_indices = @transform_1, window_bounds = array<i64: 128, 128>}, {pipeline_mode = #tpu.pipeline_mode<synchronous>, transform_indices = @transform_2, window_bounds = array<i64: 128, 128>}, {pipeline_mode = #tpu.pipeline_mode<synchronous>, transform_indices = @transform_3, window_bounds = array<i64: 1, 128>}, {transform_indices = @transform_4, window_bounds = array<i64: 8, 128>}]} {
    %c0 = arith.constant 0 : index
    %c0_0 = arith.constant 0 : index
    %0 = vector.load %arg2[%c0, %c0_0] : memref<128x128xbf16, #tpu.memory_space<vmem>>, vector<128x128xbf16>
    %c0_1 = arith.constant 0 : index
    %c0_2 = arith.constant 0 : index
    %1 = vector.load %arg3[%c0_1, %c0_2] : memref<128x128xf32, #tpu.memory_space<vmem>>, vector<128x128xf32>
    %c0_3 = arith.constant 0 : index
    %c0_4 = arith.constant 0 : index
    %2 = vector.load %arg4[%c0_3, %c0_4] : memref<1x128xf32, #tpu.memory_space<vmem>>, vector<1x128xf32>
    %c0_5 = arith.constant 0 : index
    %c0_6 = arith.constant 0 : index
    %3 = vector.load %arg1[%c0_5, %c0_6] : memref<8x256xbf16, #tpu.memory_space<vmem>>, vector<8x256xbf16>
    %4 = vector.extract_strided_slice %3 {offsets = [0, 0], sizes = [8, 128], strides = [1, 1]} : vector<8x256xbf16> to vector<8x128xbf16>
    %cst = arith.constant dense<0.000000e+00> : vector<8x128xf32>
    %5 = tpu.matmul %4, %0, %cst {dimension_numbers = #tpu.dot_dimension_numbers<[1], [0], [0], [1], [0, 0, 1, 1], [], []>} : vector<8x128xbf16>, vector<128x128xbf16>, vector<8x128xf32> -> vector<8x128xf32>
    %6 = vector.extract_strided_slice %3 {offsets = [0, 4], sizes = [8, 128], strides = [1, 1]} : vector<8x256xbf16> to vector<8x128xbf16>
    %cst_7 = arith.constant dense<0.000000e+00> : vector<8x128xf32>
    %7 = tpu.matmul %6, %0, %cst_7 {dimension_numbers = #tpu.dot_dimension_numbers<[1], [0], [0], [1], [0, 0, 1, 1], [], []>} : vector<8x128xbf16>, vector<128x128xbf16>, vector<8x128xf32> -> vector<8x128xf32>
    %8 = arith.maximumf %5, %7 : vector<8x128xf32>
    %9 = vector.extract_strided_slice %3 {offsets = [0, 8], sizes = [8, 128], strides = [1, 1]} : vector<8x256xbf16> to vector<8x128xbf16>
    %cst_8 = arith.constant dense<0.000000e+00> : vector<8x128xf32>
    %10 = tpu.matmul %9, %0, %cst_8 {dimension_numbers = #tpu.dot_dimension_numbers<[1], [0], [0], [1], [0, 0, 1, 1], [], []>} : vector<8x128xbf16>, vector<128x128xbf16>, vector<8x128xf32> -> vector<8x128xf32>
    %11 = arith.maximumf %8, %10 : vector<8x128xf32>
    %12 = vector.extract_strided_slice %3 {offsets = [0, 12], sizes = [8, 128], strides = [1, 1]} : vector<8x256xbf16> to vector<8x128xbf16>
    %cst_9 = arith.constant dense<0.000000e+00> : vector<8x128xf32>
    %13 = tpu.matmul %12, %0, %cst_9 {dimension_numbers = #tpu.dot_dimension_numbers<[1], [0], [0], [1], [0, 0, 1, 1], [], []>} : vector<8x128xbf16>, vector<128x128xbf16>, vector<8x128xf32> -> vector<8x128xf32>
    %14 = arith.maximumf %11, %13 : vector<8x128xf32>
    %15 = vector.extract_strided_slice %3 {offsets = [0, 16], sizes = [8, 128], strides = [1, 1]} : vector<8x256xbf16> to vector<8x128xbf16>
    %cst_10 = arith.constant dense<0.000000e+00> : vector<8x128xf32>
    %16 = tpu.matmul %15, %0, %cst_10 {dimension_numbers = #tpu.dot_dimension_numbers<[1], [0], [0], [1], [0, 0, 1, 1], [], []>} : vector<8x128xbf16>, vector<128x128xbf16>, vector<8x128xf32> -> vector<8x128xf32>
    %17 = arith.maximumf %14, %16 : vector<8x128xf32>
    %18 = vector.extract_strided_slice %3 {offsets = [0, 20], sizes = [8, 128], strides = [1, 1]} : vector<8x256xbf16> to vector<8x128xbf16>
    %cst_11 = arith.constant dense<0.000000e+00> : vector<8x128xf32>
    %19 = tpu.matmul %18, %0, %cst_11 {dimension_numbers = #tpu.dot_dimension_numbers<[1], [0], [0], [1], [0, 0, 1, 1], [], []>} : vector<8x128xbf16>, vector<128x128xbf16>, vector<8x128xf32> -> vector<8x128xf32>
    %20 = arith.maximumf %17, %19 : vector<8x128xf32>
    %21 = vector.extract_strided_slice %3 {offsets = [0, 24], sizes = [8, 128], strides = [1, 1]} : vector<8x256xbf16> to vector<8x128xbf16>
    %cst_12 = arith.constant dense<0.000000e+00> : vector<8x128xf32>
    %22 = tpu.matmul %21, %0, %cst_12 {dimension_numbers = #tpu.dot_dimension_numbers<[1], [0], [0], [1], [0, 0, 1, 1], [], []>} : vector<8x128xbf16>, vector<128x128xbf16>, vector<8x128xf32> -> vector<8x128xf32>
    %23 = arith.maximumf %20, %22 : vector<8x128xf32>
    %24 = vector.extract_strided_slice %3 {offsets = [0, 28], sizes = [8, 128], strides = [1, 1]} : vector<8x256xbf16> to vector<8x128xbf16>
    %cst_13 = arith.constant dense<0.000000e+00> : vector<8x128xf32>
    %25 = tpu.matmul %24, %0, %cst_13 {dimension_numbers = #tpu.dot_dimension_numbers<[1], [0], [0], [1], [0, 0, 1, 1], [], []>} : vector<8x128xbf16>, vector<128x128xbf16>, vector<8x128xf32> -> vector<8x128xf32>
    %26 = arith.maximumf %23, %25 : vector<8x128xf32>
    %27 = vector.extract_strided_slice %3 {offsets = [0, 32], sizes = [8, 128], strides = [1, 1]} : vector<8x256xbf16> to vector<8x128xbf16>
    %cst_14 = arith.constant dense<0.000000e+00> : vector<8x128xf32>
    %28 = tpu.matmul %27, %0, %cst_14 {dimension_numbers = #tpu.dot_dimension_numbers<[1], [0], [0], [1], [0, 0, 1, 1], [], []>} : vector<8x128xbf16>, vector<128x128xbf16>, vector<8x128xf32> -> vector<8x128xf32>
    %29 = arith.maximumf %26, %28 : vector<8x128xf32>
    %30 = vector.extract_strided_slice %3 {offsets = [0, 36], sizes = [8, 128], strides = [1, 1]} : vector<8x256xbf16> to vector<8x128xbf16>
    %cst_15 = arith.constant dense<0.000000e+00> : vector<8x128xf32>
    %31 = tpu.matmul %30, %0, %cst_15 {dimension_numbers = #tpu.dot_dimension_numbers<[1], [0], [0], [1], [0, 0, 1, 1], [], []>} : vector<8x128xbf16>, vector<128x128xbf16>, vector<8x128xf32> -> vector<8x128xf32>
    %32 = arith.maximumf %29, %31 : vector<8x128xf32>
    %33 = vector.extract_strided_slice %3 {offsets = [0, 40], sizes = [8, 128], strides = [1, 1]} : vector<8x256xbf16> to vector<8x128xbf16>
    %cst_16 = arith.constant dense<0.000000e+00> : vector<8x128xf32>
    %34 = tpu.matmul %33, %0, %cst_16 {dimension_numbers = #tpu.dot_dimension_numbers<[1], [0], [0], [1], [0, 0, 1, 1], [], []>} : vector<8x128xbf16>, vector<128x128xbf16>, vector<8x128xf32> -> vector<8x128xf32>
    %35 = arith.maximumf %32, %34 : vector<8x128xf32>
    %36 = vector.extract_strided_slice %3 {offsets = [0, 44], sizes = [8, 128], strides = [1, 1]} : vector<8x256xbf16> to vector<8x128xbf16>
    %cst_17 = arith.constant dense<0.000000e+00> : vector<8x128xf32>
    %37 = tpu.matmul %36, %0, %cst_17 {dimension_numbers = #tpu.dot_dimension_numbers<[1], [0], [0], [1], [0, 0, 1, 1], [], []>} : vector<8x128xbf16>, vector<128x128xbf16>, vector<8x128xf32> -> vector<8x128xf32>
    %38 = arith.maximumf %35, %37 : vector<8x128xf32>
    %cst_18 = arith.constant 0.000000e+00 : f32
    %39 = vector.broadcast %cst_18 : f32 to vector<8x128xf32>
    %40 = arith.maximumf %38, %39 : vector<8x128xf32>
    %cst_19 = arith.constant dense<0.000000e+00> : vector<8x128xf32>
    %41 = tpu.matmul %40, %1, %cst_19 {dimension_numbers = #tpu.dot_dimension_numbers<[1], [0], [0], [1], [0, 0, 1, 1], [], []>} : vector<8x128xf32>, vector<128x128xf32>, vector<8x128xf32> -> vector<8x128xf32>
    %42 = vector.broadcast %2 : vector<1x128xf32> to vector<8x128xf32>
    %43 = arith.addf %41, %42 : vector<8x128xf32>
    %c0_20 = arith.constant 0 : index
    %c0_21 = arith.constant 0 : index
    %44 = vector.load %arg5[%c0_20, %c0_21] : memref<8x128xf32, #tpu.memory_space<vmem>>, vector<8x128xf32>
    tpu.vector_store %arg5[%c0_20, %c0_21], %43 {strides = array<i32>} : memref<8x128xf32, #tpu.memory_space<vmem>>, vector<8x128xf32>,
    return
  }
  func.func @transform_0(%arg0: i32) -> (i32, i32) {
    %c0_i32 = arith.constant 0 : i32
    %c0_i32_0 = arith.constant 0 : i32
    return %arg0, %c0_i32 : i32, i32
  }
  func.func @transform_1(%arg0: i32) -> (i32, i32) {
    %c0_i32 = arith.constant 0 : i32
    %c0_i32_0 = arith.constant 0 : i32
    %c0_i32_1 = arith.constant 0 : i32
    return %c0_i32, %c0_i32_0 : i32, i32
  }
  func.func @transform_2(%arg0: i32) -> (i32, i32) {
    %c0_i32 = arith.constant 0 : i32
    %c0_i32_0 = arith.constant 0 : i32
    %c0_i32_1 = arith.constant 0 : i32
    return %c0_i32, %c0_i32_0 : i32, i32
  }
  func.func @transform_3(%arg0: i32) -> (i32, i32) {
    %c0_i32 = arith.constant 0 : i32
    %c0_i32_0 = arith.constant 0 : i32
    %c0_i32_1 = arith.constant 0 : i32
    return %c0_i32, %c0_i32_0 : i32, i32
  }
  func.func @transform_4(%arg0: i32) -> (i32, i32) {
    %c0_i32 = arith.constant 0 : i32
    %c0_i32_0 = arith.constant 0 : i32
    return %arg0, %c0_i32 : i32, i32
  }
}

</mosaic_0001>

<llo_original>
// kernel: tpu_custom_call.1
$region0: #{tpu_custom_call.1}
  #allocation0 [shape = 'u32[]', space=smem, size = 0x4, offset = 0x4, fixed_abs, tag = 'smem constant byte address 0x4 - core index']
  #allocation1 [shape = 'u32[144,128]{1,0:T(1,128)}', space=vmem, size = 0x12000, scoped, tag = 'internal scratch']
  %s0 = inlined_call_operand.hbm [shape: bf16[8,256], index: 0, kind: input, shape index: {}]
  %s1 = inlined_call_operand.hbm [shape: bf16[128,128], index: 1, kind: input, shape index: {}]
  %s2 = inlined_call_operand.hbm [shape: f32[128,128], index: 2, kind: input, shape index: {}]
  %s3 = inlined_call_operand.vmem [shape: f32[1,128], index: 3, kind: input, shape index: {}]
  %s4 = inlined_call_operand.hbm [shape: f32[8,128], index: 4, kind: output, shape index: {}]
  %s5 = sld [smem:[#allocation0]]
  $region38: #{tpu_custom_call.1} parent=0
    _
  %s7 = ssub.s32 1, %s5
  %s8 = scalar_select 0, %s7, %s5
  $region1: #{tpu_custom_call.1} parent=0
    #allocation2 [shape = 'u8[4096]{0}', space=vmem, size = 0x1000, scoped, tag = 'input window, operand 0, single buffered']
    #allocation3 [shape = 's32[1]{0}', space=sflag, size = 0x4, scoped, tag = 'scoped memory for tpu_custom_call.1']
    #allocation4 [shape = 's32[1]{0}', space=sflag, size = 0x4, scoped, tag = 'scoped memory for tpu_custom_call.1']
    #allocation5 [shape = 'u8[32768]{0}', space=vmem, size = 0x8000, scoped, tag = 'input window, operand 1, single buffered']
    #allocation6 [shape = 's32[1]{0}', space=sflag, size = 0x4, scoped, tag = 'scoped memory for tpu_custom_call.1']
    #allocation7 [shape = 'u8[65536]{0}', space=vmem, size = 0x10000, scoped, tag = 'input window, operand 2, single buffered']
    #allocation8 [shape = 'u8[4096]{0}', space=vmem, size = 0x1000, scoped, tag = 'output window, operand 0, single buffered']
    %9 = vsyncpa [#allocation3], 0
    %10 = vsyncpa [#allocation6], 0
    %11 = vsyncpa [#allocation4], 0
    // Predicated region
    $region2: #{tpu_custom_call.1} parent=1 // pred_check
      _
    $region3: #{tpu_custom_call.1} parent=1 // pred_check_branch
      %13 = sbr.rel (0) target = $region5
    $region4: #{tpu_custom_call.1} parent=1 // pred_region
      %s15 = ssub.s32 128, 128
      %16 = vsyncadd [#allocation3], %s15
      %s18 = sshll.u32 [#allocation2], 4
      %s19 = int_to_ptr.vmem [resolvable:$true] %s18
      %21 = dma.hbm_to_vmem [thread:$0]  %s0, 128, %s19, [#allocation3]
    $region5: #{tpu_custom_call.1} parent=1 // pred_fallthru
      _
    // Predicated region
    $region6: #{tpu_custom_call.1} parent=1 // pred_check
      _
    $region7: #{tpu_custom_call.1} parent=1 // pred_check_branch
      %23 = sbr.rel (0) target = $region9
    $region8: #{tpu_custom_call.1} parent=1 // pred_region
      %s25 = ssub.s32 1024, 1024
      %26 = vsyncadd [#allocation6], %s25
      %s27 = sshll.u32 [#allocation5], 4
      %s28 = int_to_ptr.vmem [resolvable:$true] %s27
      %33 = dma.hbm_to_vmem [thread:$0]  %s1, 1024, %s28, [#allocation6], 64, 64, 4
    $region9: #{tpu_custom_call.1} parent=1 // pred_fallthru
      _
    // Predicated region
    $region10: #{tpu_custom_call.1} parent=1 // pred_check
      _
    $region11: #{tpu_custom_call.1} parent=1 // pred_check_branch
      %35 = sbr.rel (0) target = $region13
    $region12: #{tpu_custom_call.1} parent=1 // pred_region
      %s37 = ssub.s32 2048, 2048
      %38 = vsyncadd [#allocation6], %s37
      %s39 = sshll.u32 [#allocation7], 4
      %s40 = int_to_ptr.vmem [resolvable:$true] %s39
      %45 = dma.hbm_to_vmem [thread:$0]  %s2, 2048, %s40, [#allocation6], 128, 128, 8
    $region13: #{tpu_custom_call.1} parent=1 // pred_fallthru
      _
    // Predicated region
    $region14: #{tpu_custom_call.1} parent=1 // pred_check
      _
    $region15: #{tpu_custom_call.1} parent=1 // pred_check_branch
      %47 = sbr.rel (0) target = $region17
    $region16: #{tpu_custom_call.1} parent=1 // pred_region
      _
    $region17: #{tpu_custom_call.1} parent=1 // pred_fallthru
      _
    // Predicated region
    $region18: #{tpu_custom_call.1} parent=1 // pred_check
      _
    $region19: #{tpu_custom_call.1} parent=1 // pred_check_branch
      %49 = sbr.rel (0) target = $region21
    $region20: #{tpu_custom_call.1} parent=1 // pred_region
      %50 = dma.done [#allocation3], 128
    $region21: #{tpu_custom_call.1} parent=1 // pred_fallthru
      _
    // Predicated region
    $region22: #{tpu_custom_call.1} parent=1 // pred_check
      _
    $region23: #{tpu_custom_call.1} parent=1 // pred_check_branch
      %52 = sbr.rel (0) target = $region25
    $region24: #{tpu_custom_call.1} parent=1 // pred_region
      %53 = dma.done [#allocation6], 1024
    $region25: #{tpu_custom_call.1} parent=1 // pred_fallthru
      _
    // Predicated region
    $region26: #{tpu_custom_call.1} parent=1 // pred_check
      _
    $region27: #{tpu_custom_call.1} parent=1 // pred_check_branch
      %55 = sbr.rel (0) target = $region29
    $region28: #{tpu_custom_call.1} parent=1 // pred_region
      %56 = dma.done [#allocation6], 2048
    $region29: #{tpu_custom_call.1} parent=1 // pred_fallthru
      _
    %v58 = vld [vmem:[#allocation5] sm:$0xf]
    %v59 = vld [vmem:[#allocation5 + $0x4] sm:$0xf]
    %v60 = vld [vmem:[#allocation5 + $0x8] sm:$0xf]
    %v61 = vld [vmem:[#allocation5 + $0xc] sm:$0xf]
    %v62 = vld [vmem:[#allocation5 + $0x10] sm:$0xf]
    %v63 = vld [vmem:[#allocation5 + $0x14] sm:$0xf]
    %v64 = vld [vmem:[#allocation5 + $0x18] sm:$0xf]
    %v65 = vld [vmem:[#allocation5 + $0x1c] sm:$0xf]
    %v66 = vld [vmem:[#allocation5 + $0x20] sm:$0xf]
    %v67 = vld [vmem:[#allocation5 + $0x24] sm:$0xf]
    %v68 = vld [vmem:[#allocation5 + $0x28] sm:$0xf]
    %v69 = vld [vmem:[#allocation5 + $0x2c] sm:$0xf]
    %v70 = vld [vmem:[#allocation5 + $0x30] sm:$0xf]
    %v71 = vld [vmem:[#allocation5 + $0x34] sm:$0xf]
    %v72 = vld [vmem:[#allocation5 + $0x38] sm:$0xf]
    %v73 = vld [vmem:[#allocation5 + $0x3c] sm:$0xf]
    %v74 = vld [vmem:[#allocation7] sm:$0xff]
    %v75 = vld [vmem:[#allocation7 + $0x8] sm:$0xff]
    %v76 = vld [vmem:[#allocation7 + $0x10] sm:$0xff]
    %v77 = vld [vmem:[#allocation7 + $0x18] sm:$0xff]
    %v78 = vld [vmem:[#allocation7 + $0x20] sm:$0xff]
    %v79 = vld [vmem:[#allocation7 + $0x28] sm:$0xff]
    %v80 = vld [vmem:[#allocation7 + $0x30] sm:$0xff]
    %v81 = vld [vmem:[#allocation7 + $0x38] sm:$0xff]
    %v82 = vld [vmem:[#allocation7 + $0x40] sm:$0xff]
    %v83 = vld [vmem:[#allocation7 + $0x48] sm:$0xff]
    %v84 = vld [vmem:[#allocation7 + $0x50] sm:$0xff]
    %v85 = vld [vmem:[#allocation7 + $0x58] sm:$0xff]
    %v86 = vld [vmem:[#allocation7 + $0x60] sm:$0xff]
    %v87 = vld [vmem:[#allocation7 + $0x68] sm:$0xff]
    %v88 = vld [vmem:[#allocation7 + $0x70] sm:$0xff]
    %v89 = vld [vmem:[#allocation7 + $0x78] sm:$0xff]
    %v90 = vld [vmem:[%s3] sm:$0x1]
    %v91 = vld [vmem:[#allocation2] sm:$0xff]
    %v108 = vunpack.c.l.b16 %v58
    %v109 = vunpack.c.l.b16 %v59
    %v110 = vunpack.c.l.b16 %v60
    %v111 = vunpack.c.l.b16 %v61
    %v112 = vunpack.c.l.b16 %v62
    %v113 = vunpack.c.l.b16 %v63
    %v114 = vunpack.c.l.b16 %v64
    %v115 = vunpack.c.l.b16 %v65
    %v116 = vunpack.c.l.b16 %v66
    %v117 = vunpack.c.l.b16 %v67
    %v118 = vunpack.c.l.b16 %v68
    %v119 = vunpack.c.l.b16 %v69
    %v120 = vunpack.c.l.b16 %v70
    %v121 = vunpack.c.l.b16 %v71
    %v122 = vunpack.c.l.b16 %v72
    %v123 = vunpack.c.l.b16 %v73
    %v124 = vpack.c.b16 %v109, %v108
    %v125 = vpack.c.b16 %v111, %v110
    %v126 = vpack.c.b16 %v113, %v112
    %v127 = vpack.c.b16 %v115, %v114
    %v128 = vpack.c.b16 %v117, %v116
    %v129 = vpack.c.b16 %v119, %v118
    %v130 = vpack.c.b16 %v121, %v120
    %v131 = vpack.c.b16 %v123, %v122
    %140 = vmatprep.subr.bf16.mxu0 0
    %141 = vmatpush1.bf16.msra.mxu0 %v124
    %142 = vmatprep.subr.bf16.mxu0 0
    %143 = vmatpush1.bf16.msra.mxu0 %v125
    %144 = vmatprep.subr.bf16.mxu0 0
    %145 = vmatpush1.bf16.msra.mxu0 %v126
    %146 = vmatprep.subr.bf16.mxu0 0
    %147 = vmatpush1.bf16.msra.mxu0 %v127
    %148 = vmatprep.subr.bf16.mxu0 0
    %149 = vmatpush1.bf16.msra.mxu0 %v128
    %150 = vmatprep.subr.bf16.mxu0 0
    %151 = vmatpush1.bf16.msra.mxu0 %v129
    %152 = vmatprep.subr.bf16.mxu0 0
    %153 = vmatpush1.bf16.msra.mxu0 %v130
    %154 = vmatprep.subr.bf16.mxu0 0
    %155 = vmatpush1.bf16.msra.mxu0 %v131
    %156 = vmatprep.subr.bf16.mxu0 0
    %157 = vmatpush1.bf16.msra.mxu0 0
    %158 = vmatprep.subr.bf16.mxu0 0
    %159 = vmatpush1.bf16.msra.mxu0 0
    %160 = vmatprep.subr.bf16.mxu0 0
    %161 = vmatpush1.bf16.msra.mxu0 0
    %162 = vmatprep.subr.bf16.mxu0 0
    %163 = vmatpush1.bf16.msra.mxu0 0
    %164 = vmatprep.subr.bf16.mxu0 0
    %165 = vmatpush1.bf16.msra.mxu0 0
    %166 = vmatprep.subr.bf16.mxu0 0
    %167 = vmatpush1.bf16.msra.mxu0 0
    %168 = vmatprep.subr.bf16.mxu0 0
    %169 = vmatpush1.bf16.msra.mxu0 0
    %170 = vmatprep.subr.bf16.mxu0 0
    %171 = vmatpush1.bf16.msra.mxu0 0
    %172 = vmatprep.mubr.bf16.mxu0 0
    %173 = vmatmul.mubr.bf16.gmra.mrb[0].mxu0 %v91
    %v174 = vpop.f32.mrb[0].mxu0
    %v175 = vadd.f32 0.0, %v174
    %v176 = vpop.f32.mrb[0].mxu0
    %v177 = vpop.f32.mrb[0].mxu0
    %v178 = vpop.f32.mrb[0].mxu0
    %179 = vdwg.mxu0
    %v181 = vunpack.c.l.b16 %v91
    %v182 = vunpack.c.h.b16 %v91
    %v183 = vpack.c.b16 %v181, %v181
    %v184 = vpack.c.b16 %v182, %v182
    %185 = vrot.lane.b32.xlu0 %v183, 124
    %v186 = vpop.permute.xlu0 %185
    %187 = vrot.lane.b32.xlu0 %v184, 124
    %v188 = vpop.permute.xlu0 %187
    %vm189 = vcmask 1014784
    %v190 = vsel %vm189, %v186, %v188
    %192 = vmatprep.subr.bf16.mxu0 0
    %193 = vmatpush1.bf16.msra.mxu0 %v124
    %194 = vmatprep.subr.bf16.mxu0 0
    %195 = vmatpush1.bf16.msra.mxu0 %v125
    %196 = vmatprep.subr.bf16.mxu0 0
    %197 = vmatpush1.bf16.msra.mxu0 %v126
    %198 = vmatprep.subr.bf16.mxu0 0
    %199 = vmatpush1.bf16.msra.mxu0 %v127
    %200 = vmatprep.subr.bf16.mxu0 0
    %201 = vmatpush1.bf16.msra.mxu0 %v128
    %202 = vmatprep.subr.bf16.mxu0 0
    %203 = vmatpush1.bf16.msra.mxu0 %v129
    %204 = vmatprep.subr.bf16.mxu0 0
    %205 = vmatpush1.bf16.msra.mxu0 %v130
    %206 = vmatprep.subr.bf16.mxu0 0
    %207 = vmatpush1.bf16.msra.mxu0 %v131
    %208 = vmatprep.subr.bf16.mxu0 0
    %209 = vmatpush1.bf16.msra.mxu0 0
    %210 = vmatprep.subr.bf16.mxu0 0
    %211 = vmatpush1.bf16.msra.mxu0 0
    %212 = vmatprep.subr.bf16.mxu0 0
    %213 = vmatpush1.bf16.msra.mxu0 0
    %214 = vmatprep.subr.bf16.mxu0 0
    %215 = vmatpush1.bf16.msra.mxu0 0
    %216 = vmatprep.subr.bf16.mxu0 0
    %217 = vmatpush1.bf16.msra.mxu0 0
    %218 = vmatprep.subr.bf16.mxu0 0
    %219 = vmatpush1.bf16.msra.mxu0 0
    %220 = vmatprep.subr.bf16.mxu0 0
    %221 = vmatpush1.bf16.msra.mxu0 0
    %222 = vmatprep.subr.bf16.mxu0 0
    %223 = vmatpush1.bf16.msra.mxu0 0
    %224 = vmatprep.mubr.bf16.mxu0 0
    %225 = vmatmul.mubr.bf16.gmra.mrb[0].mxu0 %v190
    %v226 = vpop.f32.mrb[0].mxu0
    %v227 = vadd.f32 0.0, %v226
    %v228 = vpop.f32.mrb[0].mxu0
    %v229 = vpop.f32.mrb[0].mxu0
    %v230 = vpop.f32.mrb[0].mxu0
    %231 = vdwg.mxu0
    %v232 = vmax.f32 %v175, %v227
    %233 = vrot.lane.b32.xlu0 %v183, 120
    %v234 = vpop.permute.xlu0 %233
    %235 = vrot.lane.b32.xlu0 %v184, 120
    %v236 = vpop.permute.xlu0 %235
    %vm237 = vcmask 982016
    %v238 = vsel %vm237, %v234, %v236
    %240 = vmatprep.subr.bf16.mxu0 0
    %241 = vmatpush1.bf16.msra.mxu0 %v124
    %242 = vmatprep.subr.bf16.mxu0 0
    %243 = vmatpush1.bf16.msra.mxu0 %v125
    %244 = vmatprep.subr.bf16.mxu0 0
    %245 = vmatpush1.bf16.msra.mxu0 %v126
    %246 = vmatprep.subr.bf16.mxu0 0
    %247 = vmatpush1.bf16.msra.mxu0 %v127
    %248 = vmatprep.subr.bf16.mxu0 0
    %249 = vmatpush1.bf16.msra.mxu0 %v128
    %250 = vmatprep.subr.bf16.mxu0 0
    %251 = vmatpush1.bf16.msra.mxu0 %v129
    %252 = vmatprep.subr.bf16.mxu0 0
    %253 = vmatpush1.bf16.msra.mxu0 %v130
    %254 = vmatprep.subr.bf16.mxu0 0
    %255 = vmatpush1.bf16.msra.mxu0 %v131
    %256 = vmatprep.subr.bf16.mxu0 0
    %257 = vmatpush1.bf16.msra.mxu0 0
    %258 = vmatprep.subr.bf16.mxu0 0
    %259 = vmatpush1.bf16.msra.mxu0 0
    %260 = vmatprep.subr.bf16.mxu0 0
    %261 = vmatpush1.bf16.msra.mxu0 0
    %262 = vmatprep.subr.bf16.mxu0 0
    %263 = vmatpush1.bf16.msra.mxu0 0
    %264 = vmatprep.subr.bf16.mxu0 0
    %265 = vmatpush1.bf16.msra.mxu0 0
    %266 = vmatprep.subr.bf16.mxu0 0
    %267 = vmatpush1.bf16.msra.mxu0 0
    %268 = vmatprep.subr.bf16.mxu0 0
    %269 = vmatpush1.bf16.msra.mxu0 0
    %270 = vmatprep.subr.bf16.mxu0 0
    %271 = vmatpush1.bf16.msra.mxu0 0
    %272 = vmatprep.mubr.bf16.mxu0 0
    %273 = vmatmul.mubr.bf16.gmra.mrb[0].mxu0 %v238
    %v274 = vpop.f32.mrb[0].mxu0
    %v275 = vadd.f32 0.0, %v274
    %v276 = vpop.f32.mrb[0].mxu0
    %v277 = vpop.f32.mrb[0].mxu0
    %v278 = vpop.f32.mrb[0].mxu0
    %279 = vdwg.mxu0
    %v280 = vmax.f32 %v232, %v275
    %281 = vrot.lane.b32.xlu0 %v183, 116
    %v282 = vpop.permute.xlu0 %281
    %283 = vrot.lane.b32.xlu0 %v184, 116
    %v284 = vpop.permute.xlu0 %283
    %vm285 = vcmask 949248
    %v286 = vsel %vm285, %v282, %v284
    %288 = vmatprep.subr.bf16.mxu0 0
    %289 = vmatpush1.bf16.msra.mxu0 %v124
    %290 = vmatprep.subr.bf16.mxu0 0
    %291 = vmatpush1.bf16.msra.mxu0 %v125
    %292 = vmatprep.subr.bf16.mxu0 0
    %293 = vmatpush1.bf16.msra.mxu0 %v126
    %294 = vmatprep.subr.bf16.mxu0 0
    %295 = vmatpush1.bf16.msra.mxu0 %v127
    %296 = vmatprep.subr.bf16.mxu0 0
    %297 = vmatpush1.bf16.msra.mxu0 %v128
    %298 = vmatprep.subr.bf16.mxu0 0
    %299 = vmatpush1.bf16.msra.mxu0 %v129
    %300 = vmatprep.subr.bf16.mxu0 0
    %301 = vmatpush1.bf16.msra.mxu0 %v130
    %302 = vmatprep.subr.bf16.mxu0 0
    %303 = vmatpush1.bf16.msra.mxu0 %v131
    %304 = vmatprep.subr.bf16.mxu0 0
    %305 = vmatpush1.bf16.msra.mxu0 0
    %306 = vmatprep.subr.bf16.mxu0 0
    %307 = vmatpush1.bf16.msra.mxu0 0
    %308 = vmatprep.subr.bf16.mxu0 0
    %309 = vmatpush1.bf16.msra.mxu0 0
    %310 = vmatprep.subr.bf16.mxu0 0
    %311 = vmatpush1.bf16.msra.mxu0 0
    %312 = vmatprep.subr.bf16.mxu0 0
    %313 = vmatpush1.bf16.msra.mxu0 0
    %314 = vmatprep.subr.bf16.mxu0 0
    %315 = vmatpush1.bf16.msra.mxu0 0
    %316 = vmatprep.subr.bf16.mxu0 0
    %317 = vmatpush1.bf16.msra.mxu0 0
    %318 = vmatprep.subr.bf16.mxu0 0
    %319 = vmatpush1.bf16.msra.mxu0 0
    %320 = vmatprep.mubr.bf16.mxu0 0
    %321 = vmatmul.mubr.bf16.gmra.mrb[0].mxu0 %v286
    %v322 = vpop.f32.mrb[0].mxu0
    %v323 = vadd.f32 0.0, %v322
    %v324 = vpop.f32.mrb[0].mxu0
    %v325 = vpop.f32.mrb[0].mxu0
    %v326 = vpop.f32.mrb[0].mxu0
    %327 = vdwg.mxu0
    %v328 = vmax.f32 %v280, %v323
    %329 = vrot.lane.b32.xlu0 %v183, 112
    %v330 = vpop.permute.xlu0 %329
    %331 = vrot.lane.b32.xlu0 %v184, 112
    %v332 = vpop.permute.xlu0 %331
    %vm333 = vcmask 916480
    %v334 = vsel %vm333, %v330, %v332
    %336 = vmatprep.subr.bf16.mxu0 0
    %337 = vmatpush1.bf16.msra.mxu0 %v124
    %338 = vmatprep.subr.bf16.mxu0 0
    %339 = vmatpush1.bf16.msra.mxu0 %v125
    %340 = vmatprep.subr.bf16.mxu0 0
    %341 = vmatpush1.bf16.msra.mxu0 %v126
    %342 = vmatprep.subr.bf16.mxu0 0
    %343 = vmatpush1.bf16.msra.mxu0 %v127
    %344 = vmatprep.subr.bf16.mxu0 0
    %345 = vmatpush1.bf16.msra.mxu0 %v128
    %346 = vmatprep.subr.bf16.mxu0 0
    %347 = vmatpush1.bf16.msra.mxu0 %v129
    %348 = vmatprep.subr.bf16.mxu0 0
    %349 = vmatpush1.bf16.msra.mxu0 %v130
    %350 = vmatprep.subr.bf16.mxu0 0
    %351 = vmatpush1.bf16.msra.mxu0 %v131
    %352 = vmatprep.subr.bf16.mxu0 0
    %353 = vmatpush1.bf16.msra.mxu0 0
    %354 = vmatprep.subr.bf16.mxu0 0
    %355 = vmatpush1.bf16.msra.mxu0 0
    %356 = vmatprep.subr.bf16.mxu0 0
    %357 = vmatpush1.bf16.msra.mxu0 0
    %358 = vmatprep.subr.bf16.mxu0 0
    %359 = vmatpush1.bf16.msra.mxu0 0
    %360 = vmatprep.subr.bf16.mxu0 0
    %361 = vmatpush1.bf16.msra.mxu0 0
    %362 = vmatprep.subr.bf16.mxu0 0
    %363 = vmatpush1.bf16.msra.mxu0 0
    %364 = vmatprep.subr.bf16.mxu0 0
    %365 = vmatpush1.bf16.msra.mxu0 0
    %366 = vmatprep.subr.bf16.mxu0 0
    %367 = vmatpush1.bf16.msra.mxu0 0
    %368 = vmatprep.mubr.bf16.mxu0 0
    %369 = vmatmul.mubr.bf16.gmra.mrb[0].mxu0 %v334
    %v370 = vpop.f32.mrb[0].mxu0
    %v371 = vadd.f32 0.0, %v370
    %v372 = vpop.f32.mrb[0].mxu0
    %v373 = vpop.f32.mrb[0].mxu0
    %v374 = vpop.f32.mrb[0].mxu0
    %375 = vdwg.mxu0
    %v376 = vmax.f32 %v328, %v371
    %377 = vrot.lane.b32.xlu0 %v183, 108
    %v378 = vpop.permute.xlu0 %377
    %379 = vrot.lane.b32.xlu0 %v184, 108
    %v380 = vpop.permute.xlu0 %379
    %vm381 = vcmask 883712
    %v382 = vsel %vm381, %v378, %v380
    %384 = vmatprep.subr.bf16.mxu0 0
    %385 = vmatpush1.bf16.msra.mxu0 %v124
    %386 = vmatprep.subr.bf16.mxu0 0
    %387 = vmatpush1.bf16.msra.mxu0 %v125
    %388 = vmatprep.subr.bf16.mxu0 0
    %389 = vmatpush1.bf16.msra.mxu0 %v126
    %390 = vmatprep.subr.bf16.mxu0 0
    %391 = vmatpush1.bf16.msra.mxu0 %v127
    %392 = vmatprep.subr.bf16.mxu0 0
    %393 = vmatpush1.bf16.msra.mxu0 %v128
    %394 = vmatprep.subr.bf16.mxu0 0
    %395 = vmatpush1.bf16.msra.mxu0 %v129
    %396 = vmatprep.subr.bf16.mxu0 0
    %397 = vmatpush1.bf16.msra.mxu0 %v130
    %398 = vmatprep.subr.bf16.mxu0 0
    %399 = vmatpush1.bf16.msra.mxu0 %v131
    %400 = vmatprep.subr.bf16.mxu0 0
    %401 = vmatpush1.bf16.msra.mxu0 0
    %402 = vmatprep.subr.bf16.mxu0 0
    %403 = vmatpush1.bf16.msra.mxu0 0
    %404 = vmatprep.subr.bf16.mxu0 0
    %405 = vmatpush1.bf16.msra.mxu0 0
    %406 = vmatprep.subr.bf16.mxu0 0
    %407 = vmatpush1.bf16.msra.mxu0 0
    %408 = vmatprep.subr.bf16.mxu0 0
    %409 = vmatpush1.bf16.msra.mxu0 0
    %410 = vmatprep.subr.bf16.mxu0 0
    %411 = vmatpush1.bf16.msra.mxu0 0
    %412 = vmatprep.subr.bf16.mxu0 0
    %413 = vmatpush1.bf16.msra.mxu0 0
    %414 = vmatprep.subr.bf16.mxu0 0
    %415 = vmatpush1.bf16.msra.mxu0 0
    %416 = vmatprep.mubr.bf16.mxu0 0
    %417 = vmatmul.mubr.bf16.gmra.mrb[0].mxu0 %v382
    %v418 = vpop.f32.mrb[0].mxu0
    %v419 = vadd.f32 0.0, %v418
    %v420 = vpop.f32.mrb[0].mxu0
    %v421 = vpop.f32.mrb[0].mxu0
    %v422 = vpop.f32.mrb[0].mxu0
    %423 = vdwg.mxu0
    %v424 = vmax.f32 %v376, %v419
    %425 = vrot.lane.b32.xlu0 %v183, 104
    %v426 = vpop.permute.xlu0 %425
    %427 = vrot.lane.b32.xlu0 %v184, 104
    %v428 = vpop.permute.xlu0 %427
    %vm429 = vcmask 850944
    %v430 = vsel %vm429, %v426, %v428
    %432 = vmatprep.subr.bf16.mxu0 0
    %433 = vmatpush1.bf16.msra.mxu0 %v124
    %434 = vmatprep.subr.bf16.mxu0 0
    %435 = vmatpush1.bf16.msra.mxu0 %v125
    %436 = vmatprep.subr.bf16.mxu0 0
    %437 = vmatpush1.bf16.msra.mxu0 %v126
    %438 = vmatprep.subr.bf16.mxu0 0
    %439 = vmatpush1.bf16.msra.mxu0 %v127
    %440 = vmatprep.subr.bf16.mxu0 0
    %441 = vmatpush1.bf16.msra.mxu0 %v128
    %442 = vmatprep.subr.bf16.mxu0 0
    %443 = vmatpush1.bf16.msra.mxu0 %v129
    %444 = vmatprep.subr.bf16.mxu0 0
    %445 = vmatpush1.bf16.msra.mxu0 %v130
    %446 = vmatprep.subr.bf16.mxu0 0
    %447 = vmatpush1.bf16.msra.mxu0 %v131
    %448 = vmatprep.subr.bf16.mxu0 0
    %449 = vmatpush1.bf16.msra.mxu0 0
    %450 = vmatprep.subr.bf16.mxu0 0
    %451 = vmatpush1.bf16.msra.mxu0 0
    %452 = vmatprep.subr.bf16.mxu0 0
    %453 = vmatpush1.bf16.msra.mxu0 0
    %454 = vmatprep.subr.bf16.mxu0 0
    %455 = vmatpush1.bf16.msra.mxu0 0
    %456 = vmatprep.subr.bf16.mxu0 0
    %457 = vmatpush1.bf16.msra.mxu0 0
    %458 = vmatprep.subr.bf16.mxu0 0
    %459 = vmatpush1.bf16.msra.mxu0 0
    %460 = vmatprep.subr.bf16.mxu0 0
    %461 = vmatpush1.bf16.msra.mxu0 0
    %462 = vmatprep.subr.bf16.mxu0 0
    %463 = vmatpush1.bf16.msra.mxu0 0
    %464 = vmatprep.mubr.bf16.mxu0 0
    %465 = vmatmul.mubr.bf16.gmra.mrb[0].mxu0 %v430
    %v466 = vpop.f32.mrb[0].mxu0
    %v467 = vadd.f32 0.0, %v466
    %v468 = vpop.f32.mrb[0].mxu0
    %v469 = vpop.f32.mrb[0].mxu0
    %v470 = vpop.f32.mrb[0].mxu0
    %471 = vdwg.mxu0
    %v472 = vmax.f32 %v424, %v467
    %473 = vrot.lane.b32.xlu0 %v183, 100
    %v474 = vpop.permute.xlu0 %473
    %475 = vrot.lane.b32.xlu0 %v184, 100
    %v476 = vpop.permute.xlu0 %475
    %vm477 = vcmask 818176
    %v478 = vsel %vm477, %v474, %v476
    %480 = vmatprep.subr.bf16.mxu0 0
    %481 = vmatpush1.bf16.msra.mxu0 %v124
    %482 = vmatprep.subr.bf16.mxu0 0
    %483 = vmatpush1.bf16.msra.mxu0 %v125
    %484 = vmatprep.subr.bf16.mxu0 0
    %485 = vmatpush1.bf16.msra.mxu0 %v126
    %486 = vmatprep.subr.bf16.mxu0 0
    %487 = vmatpush1.bf16.msra.mxu0 %v127
    %488 = vmatprep.subr.bf16.mxu0 0
    %489 = vmatpush1.bf16.msra.mxu0 %v128
    %490 = vmatprep.subr.bf16.mxu0 0
    %491 = vmatpush1.bf16.msra.mxu0 %v129
    %492 = vmatprep.subr.bf16.mxu0 0
    %493 = vmatpush1.bf16.msra.mxu0 %v130
    %494 = vmatprep.subr.bf16.mxu0 0
    %495 = vmatpush1.bf16.msra.mxu0 %v131
    %496 = vmatprep.subr.bf16.mxu0 0
    %497 = vmatpush1.bf16.msra.mxu0 0
    %498 = vmatprep.subr.bf16.mxu0 0
    %499 = vmatpush1.bf16.msra.mxu0 0
    %500 = vmatprep.subr.bf16.mxu0 0
    %501 = vmatpush1.bf16.msra.mxu0 0
    %502 = vmatprep.subr.bf16.mxu0 0
    %503 = vmatpush1.bf16.msra.mxu0 0
    %504 = vmatprep.subr.bf16.mxu0 0
    %505 = vmatpush1.bf16.msra.mxu0 0
    %506 = vmatprep.subr.bf16.mxu0 0
    %507 = vmatpush1.bf16.msra.mxu0 0
    %508 = vmatprep.subr.bf16.mxu0 0
    %509 = vmatpush1.bf16.msra.mxu0 0
    %510 = vmatprep.subr.bf16.mxu0 0
    %511 = vmatpush1.bf16.msra.mxu0 0
    %512 = vmatprep.mubr.bf16.mxu0 0
    %513 = vmatmul.mubr.bf16.gmra.mrb[0].mxu0 %v478
    %v514 = vpop.f32.mrb[0].mxu0
    %v515 = vadd.f32 0.0, %v514
    %v516 = vpop.f32.mrb[0].mxu0
    %v517 = vpop.f32.mrb[0].mxu0
    %v518 = vpop.f32.mrb[0].mxu0
    %519 = vdwg.mxu0
    %v520 = vmax.f32 %v472, %v515
    %521 = vrot.lane.b32.xlu0 %v183, 96
    %v522 = vpop.permute.xlu0 %521
    %523 = vrot.lane.b32.xlu0 %v184, 96
    %v524 = vpop.permute.xlu0 %523
    %vm525 = vcmask 785408
    %v526 = vsel %vm525, %v522, %v524
    %528 = vmatprep.subr.bf16.mxu0 0
    %529 = vmatpush1.bf16.msra.mxu0 %v124
    %530 = vmatprep.subr.bf16.mxu0 0
    %531 = vmatpush1.bf16.msra.mxu0 %v125
    %532 = vmatprep.subr.bf16.mxu0 0
    %533 = vmatpush1.bf16.msra.mxu0 %v126
    %534 = vmatprep.subr.bf16.mxu0 0
    %535 = vmatpush1.bf16.msra.mxu0 %v127
    %536 = vmatprep.subr.bf16.mxu0 0
    %537 = vmatpush1.bf16.msra.mxu0 %v128
    %538 = vmatprep.subr.bf16.mxu0 0
    %539 = vmatpush1.bf16.msra.mxu0 %v129
    %540 = vmatprep.subr.bf16.mxu0 0
    %541 = vmatpush1.bf16.msra.mxu0 %v130
    %542 = vmatprep.subr.bf16.mxu0 0
    %543 = vmatpush1.bf16.msra.mxu0 %v131
    %544 = vmatprep.subr.bf16.mxu0 0
    %545 = vmatpush1.bf16.msra.mxu0 0
    %546 = vmatprep.subr.bf16.mxu0 0
    %547 = vmatpush1.bf16.msra.mxu0 0
    %548 = vmatprep.subr.bf16.mxu0 0
    %549 = vmatpush1.bf16.msra.mxu0 0
    %550 = vmatprep.subr.bf16.mxu0 0
    %551 = vmatpush1.bf16.msra.mxu0 0
    %552 = vmatprep.subr.bf16.mxu0 0
    %553 = vmatpush1.bf16.msra.mxu0 0
    %554 = vmatprep.subr.bf16.mxu0 0
    %555 = vmatpush1.bf16.msra.mxu0 0
    %556 = vmatprep.subr.bf16.mxu0 0
    %557 = vmatpush1.bf16.msra.mxu0 0
    %558 = vmatprep.subr.bf16.mxu0 0
    %559 = vmatpush1.bf16.msra.mxu0 0
    %560 = vmatprep.mubr.bf16.mxu0 0
    %561 = vmatmul.mubr.bf16.gmra.mrb[0].mxu0 %v526
    %v562 = vpop.f32.mrb[0].mxu0
    %v563 = vadd.f32 0.0, %v562
    %v564 = vpop.f32.mrb[0].mxu0
    %v565 = vpop.f32.mrb[0].mxu0
    %v566 = vpop.f32.mrb[0].mxu0
    %567 = vdwg.mxu0
    %v568 = vmax.f32 %v520, %v563
    %569 = vrot.lane.b32.xlu0 %v183, 92
    %v570 = vpop.permute.xlu0 %569
    %571 = vrot.lane.b32.xlu0 %v184, 92
    %v572 = vpop.permute.xlu0 %571
    %vm573 = vcmask 752640
    %v574 = vsel %vm573, %v570, %v572
    %576 = vmatprep.subr.bf16.mxu0 0
    %577 = vmatpush1.bf16.msra.mxu0 %v124
    %578 = vmatprep.subr.bf16.mxu0 0
    %579 = vmatpush1.bf16.msra.mxu0 %v125
    %580 = vmatprep.subr.bf16.mxu0 0
    %581 = vmatpush1.bf16.msra.mxu0 %v126
    %582 = vmatprep.subr.bf16.mxu0 0
    %583 = vmatpush1.bf16.msra.mxu0 %v127
    %584 = vmatprep.subr.bf16.mxu0 0
    %585 = vmatpush1.bf16.msra.mxu0 %v128
    %586 = vmatprep.subr.bf16.mxu0 0
    %587 = vmatpush1.bf16.msra.mxu0 %v129
    %588 = vmatprep.subr.bf16.mxu0 0
    %589 = vmatpush1.bf16.msra.mxu0 %v130
    %590 = vmatprep.subr.bf16.mxu0 0
    %591 = vmatpush1.bf16.msra.mxu0 %v131
    %592 = vmatprep.subr.bf16.mxu0 0
    %593 = vmatpush1.bf16.msra.mxu0 0
    %594 = vmatprep.subr.bf16.mxu0 0
    %595 = vmatpush1.bf16.msra.mxu0 0
    %596 = vmatprep.subr.bf16.mxu0 0
    %597 = vmatpush1.bf16.msra.mxu0 0
    %598 = vmatprep.subr.bf16.mxu0 0
    %599 = vmatpush1.bf16.msra.mxu0 0
    %600 = vmatprep.subr.bf16.mxu0 0
    %601 = vmatpush1.bf16.msra.mxu0 0
    %602 = vmatprep.subr.bf16.mxu0 0
    %603 = vmatpush1.bf16.msra.mxu0 0
    %604 = vmatprep.subr.bf16.mxu0 0
    %605 = vmatpush1.bf16.msra.mxu0 0
    %606 = vmatprep.subr.bf16.mxu0 0
    %607 = vmatpush1.bf16.msra.mxu0 0
    %608 = vmatprep.mubr.bf16.mxu0 0
    %609 = vmatmul.mubr.bf16.gmra.mrb[0].mxu0 %v574
    %v610 = vpop.f32.mrb[0].mxu0
    %v611 = vadd.f32 0.0, %v610
    %v612 = vpop.f32.mrb[0].mxu0
    %v613 = vpop.f32.mrb[0].mxu0
    %v614 = vpop.f32.mrb[0].mxu0
    %615 = vdwg.mxu0
    %v616 = vmax.f32 %v568, %v611
    %617 = vrot.lane.b32.xlu0 %v183, 88
    %v618 = vpop.permute.xlu0 %617
    %619 = vrot.lane.b32.xlu0 %v184, 88
    %v620 = vpop.permute.xlu0 %619
    %vm621 = vcmask 719872
    %v622 = vsel %vm621, %v618, %v620
    %624 = vmatprep.subr.bf16.mxu0 0
    %625 = vmatpush1.bf16.msra.mxu0 %v124
    %626 = vmatprep.subr.bf16.mxu0 0
    %627 = vmatpush1.bf16.msra.mxu0 %v125
    %628 = vmatprep.subr.bf16.mxu0 0
    %629 = vmatpush1.bf16.msra.mxu0 %v126
    %630 = vmatprep.subr.bf16.mxu0 0
    %631 = vmatpush1.bf16.msra.mxu0 %v127
    %632 = vmatprep.subr.bf16.mxu0 0
    %633 = vmatpush1.bf16.msra.mxu0 %v128
    %634 = vmatprep.subr.bf16.mxu0 0
    %635 = vmatpush1.bf16.msra.mxu0 %v129
    %636 = vmatprep.subr.bf16.mxu0 0
    %637 = vmatpush1.bf16.msra.mxu0 %v130
    %638 = vmatprep.subr.bf16.mxu0 0
    %639 = vmatpush1.bf16.msra.mxu0 %v131
    %640 = vmatprep.subr.bf16.mxu0 0
    %641 = vmatpush1.bf16.msra.mxu0 0
    %642 = vmatprep.subr.bf16.mxu0 0
    %643 = vmatpush1.bf16.msra.mxu0 0
    %644 = vmatprep.subr.bf16.mxu0 0
    %645 = vmatpush1.bf16.msra.mxu0 0
    %646 = vmatprep.subr.bf16.mxu0 0
    %647 = vmatpush1.bf16.msra.mxu0 0
    %648 = vmatprep.subr.bf16.mxu0 0
    %649 = vmatpush1.bf16.msra.mxu0 0
    %650 = vmatprep.subr.bf16.mxu0 0
    %651 = vmatpush1.bf16.msra.mxu0 0
    %652 = vmatprep.subr.bf16.mxu0 0
    %653 = vmatpush1.bf16.msra.mxu0 0
    %654 = vmatprep.subr.bf16.mxu0 0
    %655 = vmatpush1.bf16.msra.mxu0 0
    %656 = vmatprep.mubr.bf16.mxu0 0
    %657 = vmatmul.mubr.bf16.gmra.mrb[0].mxu0 %v622
    %v658 = vpop.f32.mrb[0].mxu0
    %v659 = vadd.f32 0.0, %v658
    %v660 = vpop.f32.mrb[0].mxu0
    %v661 = vpop.f32.mrb[0].mxu0
    %v662 = vpop.f32.mrb[0].mxu0
    %663 = vdwg.mxu0
    %v664 = vmax.f32 %v616, %v659
    %665 = vrot.lane.b32.xlu0 %v183, 84
    %v666 = vpop.permute.xlu0 %665
    %667 = vrot.lane.b32.xlu0 %v184, 84
    %v668 = vpop.permute.xlu0 %667
    %vm669 = vcmask 687104
    %v670 = vsel %vm669, %v666, %v668
    %672 = vmatprep.subr.bf16.mxu0 0
    %673 = vmatpush1.bf16.msra.mxu0 %v124
    %674 = vmatprep.subr.bf16.mxu0 0
    %675 = vmatpush1.bf16.msra.mxu0 %v125
    %676 = vmatprep.subr.bf16.mxu0 0
    %677 = vmatpush1.bf16.msra.mxu0 %v126
    %678 = vmatprep.subr.bf16.mxu0 0
    %679 = vmatpush1.bf16.msra.mxu0 %v127
    %680 = vmatprep.subr.bf16.mxu0 0
    %681 = vmatpush1.bf16.msra.mxu0 %v128
    %682 = vmatprep.subr.bf16.mxu0 0
    %683 = vmatpush1.bf16.msra.mxu0 %v129
    %684 = vmatprep.subr.bf16.mxu0 0
    %685 = vmatpush1.bf16.msra.mxu0 %v130
    %686 = vmatprep.subr.bf16.mxu0 0
    %687 = vmatpush1.bf16.msra.mxu0 %v131
    %688 = vmatprep.subr.bf16.mxu0 0
    %689 = vmatpush1.bf16.msra.mxu0 0
    %690 = vmatprep.subr.bf16.mxu0 0
    %691 = vmatpush1.bf16.msra.mxu0 0
    %692 = vmatprep.subr.bf16.mxu0 0
    %693 = vmatpush1.bf16.msra.mxu0 0
    %694 = vmatprep.subr.bf16.mxu0 0
    %695 = vmatpush1.bf16.msra.mxu0 0
    %696 = vmatprep.subr.bf16.mxu0 0
    %697 = vmatpush1.bf16.msra.mxu0 0
    %698 = vmatprep.subr.bf16.mxu0 0
    %699 = vmatpush1.bf16.msra.mxu0 0
    %700 = vmatprep.subr.bf16.mxu0 0
    %701 = vmatpush1.bf16.msra.mxu0 0
    %702 = vmatprep.subr.bf16.mxu0 0
    %703 = vmatpush1.bf16.msra.mxu0 0
    %704 = vmatprep.mubr.bf16.mxu0 0
    %705 = vmatmul.mubr.bf16.gmra.mrb[0].mxu0 %v670
    %v706 = vpop.f32.mrb[0].mxu0
    %v707 = vadd.f32 0.0, %v706
    %v708 = vpop.f32.mrb[0].mxu0
    %v709 = vpop.f32.mrb[0].mxu0
    %v710 = vpop.f32.mrb[0].mxu0
    %711 = vdwg.mxu0
    %v712 = vmax.f32 %v664, %v707
    %v713 = vmax.f32 %v712, 0.0
    %v715 = vlaneseq
    %v716 = vshrl.u32 %v715, 7
    %v717 = vsub.s32 0, %v716
    %v718 = vrot.slane %v90, %v717
    %720 = vmatprep.subr.mxu0 0.0
    %721 = vmatpush1.msra.mxu0 %v74
    %722 = vmatprep.subr.mxu0 0.0
    %723 = vmatpush1.msra.mxu0 %v75
    %724 = vmatprep.subr.mxu0 0.0
    %725 = vmatpush1.msra.mxu0 %v76
    %726 = vmatprep.subr.mxu0 0.0
    %727 = vmatpush1.msra.mxu0 %v77
    %728 = vmatprep.subr.mxu0 0.0
    %729 = vmatpush1.msra.mxu0 %v78
    %730 = vmatprep.subr.mxu0 0.0
    %731 = vmatpush1.msra.mxu0 %v79
    %732 = vmatprep.subr.mxu0 0.0
    %733 = vmatpush1.msra.mxu0 %v80
    %734 = vmatprep.subr.mxu0 0.0
    %735 = vmatpush1.msra.mxu0 %v81
    %736 = vmatprep.subr.mxu0 0.0
    %737 = vmatpush1.msra.mxu0 %v82
    %738 = vmatprep.subr.mxu0 0.0
    %739 = vmatpush1.msra.mxu0 %v83
    %740 = vmatprep.subr.mxu0 0.0
    %741 = vmatpush1.msra.mxu0 %v84
    %742 = vmatprep.subr.mxu0 0.0
    %743 = vmatpush1.msra.mxu0 %v85
    %744 = vmatprep.subr.mxu0 0.0
    %745 = vmatpush1.msra.mxu0 %v86
    %746 = vmatprep.subr.mxu0 0.0
    %747 = vmatpush1.msra.mxu0 %v87
    %748 = vmatprep.subr.mxu0 0.0
    %749 = vmatpush1.msra.mxu0 %v88
    %750 = vmatprep.subr.mxu0 0.0
    %751 = vmatpush1.msra.mxu0 %v89
    %752 = vmatprep.subr.mxu0 0.0
    %753 = vmatpush1.msra.mxu0 0.0
    %754 = vmatprep.subr.mxu0 0.0
    %755 = vmatpush1.msra.mxu0 0.0
    %756 = vmatprep.subr.mxu0 0.0
    %757 = vmatpush1.msra.mxu0 0.0
    %758 = vmatprep.subr.mxu0 0.0
    %759 = vmatpush1.msra.mxu0 0.0
    %760 = vmatprep.subr.mxu0 0.0
    %761 = vmatpush1.msra.mxu0 0.0
    %762 = vmatprep.subr.mxu0 0.0
    %763 = vmatpush1.msra.mxu0 0.0
    %764 = vmatprep.subr.mxu0 0.0
    %765 = vmatpush1.msra.mxu0 0.0
    %766 = vmatprep.subr.mxu0 0.0
    %767 = vmatpush1.msra.mxu0 0.0
    %768 = vmatprep.subr.mxu0 0.0
    %769 = vmatpush1.msra.mxu0 0.0
    %770 = vmatprep.subr.mxu0 0.0
    %771 = vmatpush1.msra.mxu0 0.0
    %772 = vmatprep.subr.mxu0 0.0
    %773 = vmatpush1.msra.mxu0 0.0
    %774 = vmatprep.subr.mxu0 0.0
    %775 = vmatpush1.msra.mxu0 0.0
    %776 = vmatprep.subr.mxu0 0.0
    %777 = vmatpush1.msra.mxu0 0.0
    %778 = vmatprep.subr.mxu0 0.0
    %779 = vmatpush1.msra.mxu0 0.0
    %780 = vmatprep.subr.mxu0 0.0
    %781 = vmatpush1.msra.mxu0 0.0
    %782 = vmatprep.subr.mxu0 0.0
    %783 = vmatpush1.msra.mxu0 0.0
    %784 = vmatprep.mubr.f32.mxu0 0.0
    %785 = vmatmul.mubr.f32.gmra.mrb[0].mxu0 %v713
    %v786 = vpop.f32.mrb[0].mxu0
    %v787 = vadd.f32 %v718, %v786
    %v788 = vpop.f32.mrb[0].mxu0
    %789 = vdwg.mxu0
    %790 = vst [vmem:[#allocation8] sm:$0xff] %v787
    // Predicated region
    $region30: #{tpu_custom_call.1} parent=1 // pred_check
      _
    $region31: #{tpu_custom_call.1} parent=1 // pred_check_branch
      %792 = sbr.rel (0) target = $region33
    $region32: #{tpu_custom_call.1} parent=1 // pred_region
      %s794 = ssub.s32 128, 128
      %795 = vsyncadd [#allocation4], %s794
      %s797 = sshll.u32 [#allocation8], 4
      %s798 = int_to_ptr.vmem [resolvable:$true] %s797
      %800 = dma.vmem_to_hbm [thread:$0]  %s798, 128, %s4, [#allocation4]
    $region33: #{tpu_custom_call.1} parent=1 // pred_fallthru
      _
    // Predicated region
    $region34: #{tpu_custom_call.1} parent=1 // pred_check
      _
    $region35: #{tpu_custom_call.1} parent=1 // pred_check_branch
      %802 = sbr.rel (0) target = $region37
    $region36: #{tpu_custom_call.1} parent=1 // pred_region
      %803 = dma.done [#allocation4], 128
    $region37: #{tpu_custom_call.1} parent=1 // pred_fallthru
      _
    %804 = vsyncpa [#allocation3], 1
    %805 = vsyncpa [#allocation6], 1
    %806 = vsyncpa [#allocation4], 1

</llo_original>
